<compile_context>
chip_gen: v5e
topology: v5e:2x2
jax: 0.10.0
libtpu: 0.0.40
codegen_flags: <defaults>
</compile_context>

<pallas_src>
import jax
import jax.numpy as jnp
import numpy as np
from jax.experimental import pallas as pl
from jax.experimental.pallas import tpu as pltpu


def _attention_gate_kernel(g_ref, x_ref, w_ref, b_ref, wpsi_ref, bpsi_ref,
                           out_ref):
    # g_ref:    (F_g,  TM)        f32  - pixels on lanes (batch dim squeezed)
    # x_ref:    (F_l,  TM)        f32
    # w_ref:    (F_int, F_g+F_l)  bf16 - [Wg_eff | Wx_eff], BN scale folded in
    # b_ref:    (F_int, 1)        f32  - combined folded bias of both branches
    # wpsi_ref: (1, F_int)        f32  - BN scale folded in
    # bpsi_ref: (1, 1)            f32
    # out_ref:  (F_l,  TM)        f32  - lane-dense stores
    x = x_ref[...]

    # Fused branch matmul: t^T = [Wg|Wx] @ [g;x]^T + b   -> (F_int, TM)
    gx = jnp.concatenate([g_ref[...], x], axis=0).astype(jnp.bfloat16)
    t = jnp.dot(w_ref[...], gx, preferred_element_type=jnp.float32)
    t = jnp.maximum(t + b_ref[...], 0.0)

    # psi^T = sigmoid(Wpsi_eff @ t^T + bpsi)  -> (1, TM)
    logit = jnp.dot(wpsi_ref[...], t, preferred_element_type=jnp.float32)
    logit = logit + bpsi_ref[...]
    psi = 1.0 / (1.0 + jnp.exp(-logit))      # exp runs on the EUP slot

    out_ref[...] = (x * psi).astype(out_ref.dtype)


def _fold_conv_bn(w_oihw, b, gamma, beta, mean, var, eps):
    """Fold Conv2d(1x1, bias=True) + BatchNorm2d(eval) into (Cout, Cin) weight
    and (Cout,) bias:  y = W_eff @ in + b_eff."""
    cout, cin = w_oihw.shape[0], w_oihw.shape[1]
    w = w_oihw.reshape(cout, cin).astype(jnp.float32)
    scale = gamma.astype(jnp.float32) / jnp.sqrt(var.astype(jnp.float32) + eps)
    w_eff = w * scale[:, None]
    b_eff = scale * (b.astype(jnp.float32) - mean.astype(jnp.float32)) \
        + beta.astype(jnp.float32)
    return w_eff, b_eff


def attention_block_forward(g, x, params, *, eps=1e-5, block_hw=32768):
    """Attention_block.forward.  g: (N, F_g, H, W), x: (N, F_l, H, W) (NCHW)."""
    N, F_g, H, W = g.shape
    Nx, F_l, Hx, Wx_ = x.shape
    assert (N, H, W) == (Nx, Hx, Wx_)
    HW = H * W

    wg_t, bg = _fold_conv_bn(params["wg"], params["bg"], params["gamma_g"],
                             params["beta_g"], params["mean_g"],
                             params["var_g"], eps)
    wx_t, bx = _fold_conv_bn(params["wx"], params["bx"], params["gamma_x"],
                             params["beta_x"], params["mean_x"],
                             params["var_x"], eps)
    wpsi_t, bpsi = _fold_conv_bn(params["wpsi"], params["bpsi"],
                                 params["gamma_p"], params["beta_p"],
                                 params["mean_p"], params["var_p"], eps)
    F_int = wg_t.shape[0]

    # Fused branch weight [Wg_eff | Wx_eff] in bf16 (native MXU path); biases
    # of the two branches combine pre-ReLU.
    w_cat = jnp.concatenate([wg_t, wx_t], axis=1).astype(jnp.bfloat16)
    b_col = (bg + bx).reshape(F_int, 1)
    wpsi_row = wpsi_t.reshape(1, F_int)
    bpsi_s = bpsi.reshape(1, 1)

    # Free reshape NCHW -> (N, C, H*W): no transpose, no pad, no dtype copy.
    g3 = g.reshape(N, F_g, HW)
    x3 = x.reshape(N, F_l, HW)

    # Lane-dim tiling: use the full H*W when it fits the tile budget (no 128
    # constraint then); otherwise a multiple of 128 and let Pallas mask the
    # ragged tail (no jnp.pad HBM round trip).
    if HW <= block_hw:
        blk = HW
        n_blocks = 1
    else:
        blk = max(128, (block_hw // 128) * 128)
        n_blocks = pl.cdiv(HW, blk)

    out3 = pl.pallas_call(
        _attention_gate_kernel,
        out_shape=jax.ShapeDtypeStruct((N, F_l, HW), jnp.float32),
        grid_spec=pltpu.PrefetchScalarGridSpec(
            num_scalar_prefetch=0,
            grid=(N, n_blocks),
            in_specs=[
                pl.BlockSpec((None, F_g, blk), lambda n, i: (n, 0, i)),
                pl.BlockSpec((None, F_l, blk), lambda n, i: (n, 0, i)),
                pl.BlockSpec((F_int, F_g + F_l), lambda n, i: (0, 0)),
                pl.BlockSpec((F_int, 1), lambda n, i: (0, 0)),
                pl.BlockSpec((1, F_int), lambda n, i: (0, 0)),
                pl.BlockSpec((1, 1), lambda n, i: (0, 0)),
            ],
            out_specs=pl.BlockSpec((None, F_l, blk), lambda n, i: (n, 0, i)),
        ),
        compiler_params=pltpu.CompilerParams(
            # Both axes independent -> shard across TensorCores (v7x megacore).
            dimension_semantics=("parallel", "parallel"),
            # <= 48 MiB so large tiles still fit v7x's 64 MiB physical VMEM;
            # default block_hw=32768 uses only ~8-16 MiB.
            vmem_limit_bytes=48 * 1024 * 1024,
        ),
    )(g3, x3, w_cat, b_col, wpsi_row, bpsi_s)

    # (N, F_l, H*W) -> NCHW: free reshape.
    return out3.reshape(N, F_l, H, W)


def _reference(g, x, params, *, eps=1e-5):
    """Pure-JAX reference of Attention_block.forward (eval-mode BN)."""
    def conv_bn(inp, w, b, gamma, beta, mean, var):
        y = jnp.einsum("nchw,oc->nohw", inp.astype(jnp.float32),
                       w[:, :, 0, 0].astype(jnp.float32))
        y = y + b[None, :, None, None]
        inv = 1.0 / jnp.sqrt(var + eps)
        return (y - mean[None, :, None, None]) * \
            (gamma * inv)[None, :, None, None] + beta[None, :, None, None]

    g1 = conv_bn(g, params["wg"], params["bg"], params["gamma_g"],
                 params["beta_g"], params["mean_g"], params["var_g"])
    x1 = conv_bn(x, params["wx"], params["bx"], params["gamma_x"],
                 params["beta_x"], params["mean_x"], params["var_x"])
    t = jnp.maximum(g1 + x1, 0.0)
    p = conv_bn(t, params["wpsi"], params["bpsi"], params["gamma_p"],
                params["beta_p"], params["mean_p"], params["var_p"])
    p = jax.nn.sigmoid(p)
    return x * p


if __name__ == "__main__":
    # Attention_block(F_g=4, F_l=4, F_int=32) on (N=2, C, 16, 16) inputs.
    N, F_g, F_l, F_int, H, W = 2, 4, 4, 32, 16, 16

    key = jax.random.PRNGKey(0)
    keys = jax.random.split(key, 20)

    g = jax.random.normal(keys[0], (N, F_g, H, W), jnp.float32)
    x = jax.random.normal(keys[1], (N, F_l, H, W), jnp.float32)

    params = dict(
        wg=0.2 * jax.random.normal(keys[2], (F_int, F_g, 1, 1), jnp.float32),
        bg=0.1 * jax.random.normal(keys[3], (F_int,), jnp.float32),
        gamma_g=1.0 + 0.1 * jax.random.normal(keys[4], (F_int,), jnp.float32),
        beta_g=0.1 * jax.random.normal(keys[5], (F_int,), jnp.float32),
        mean_g=0.1 * jax.random.normal(keys[6], (F_int,), jnp.float32),
        var_g=jnp.abs(jax.random.normal(keys[7], (F_int,), jnp.float32)) + 0.5,
        wx=0.2 * jax.random.normal(keys[8], (F_int, F_l, 1, 1), jnp.float32),
        bx=0.1 * jax.random.normal(keys[9], (F_int,), jnp.float32),
        gamma_x=1.0 + 0.1 * jax.random.normal(keys[10], (F_int,), jnp.float32),
        beta_x=0.1 * jax.random.normal(keys[11], (F_int,), jnp.float32),
        mean_x=0.1 * jax.random.normal(keys[12], (F_int,), jnp.float32),
        var_x=jnp.abs(jax.random.normal(keys[13], (F_int,), jnp.float32)) + 0.5,
        wpsi=0.2 * jax.random.normal(keys[14], (1, F_int, 1, 1), jnp.float32),
        bpsi=0.1 * jax.random.normal(keys[15], (1,), jnp.float32),
        gamma_p=1.0 + 0.1 * jax.random.normal(keys[16], (1,), jnp.float32),
        beta_p=0.1 * jax.random.normal(keys[17], (1,), jnp.float32),
        mean_p=0.1 * jax.random.normal(keys[18], (1,), jnp.float32),
        var_p=jnp.abs(jax.random.normal(keys[19], (1,), jnp.float32)) + 0.5,
    )

    # block_hw=128 so this tiny test (H*W = 256) exercises a (2, 2) "parallel"
    # grid with pipelined tiles; production sizes use the 32K default.
    out = attention_block_forward(g, x, params, block_hw=128)
    out = jax.block_until_ready(out)

    ref = jax.block_until_ready(_reference(g, x, params))

    assert out.shape == (N, F_l, H, W), out.shape
    # The branch matmul runs in bf16 (native MXU path) -> bf16-level tolerance.
    np.testing.assert_allclose(np.asarray(out), np.asarray(ref),
                               rtol=2e-2, atol=2e-2)
    print("KERNEL_OK")
</pallas_src>

<mosaic_0001>
module attributes {stable_mosaic.version = 11 : i64} {
  func.func @_attention_gate_kernel(%arg0: i32, %arg1: i32, %arg2: memref<1x4x128xf32, #tpu.memory_space<vmem>>, %arg3: memref<1x4x128xf32, #tpu.memory_space<vmem>>, %arg4: memref<32x8xbf16, #tpu.memory_space<vmem>>, %arg5: memref<32x1xf32, #tpu.memory_space<vmem>>, %arg6: memref<1x32xf32, #tpu.memory_space<vmem>>, %arg7: memref<1x1xf32, #tpu.memory_space<vmem>>, %arg8: memref<1x4x128xf32, #tpu.memory_space<vmem>>) attributes {dimension_semantics = [#tpu.dimension_semantics<parallel>, #tpu.dimension_semantics<parallel>], iteration_bounds = array<i64: 2, 2>, scalar_prefetch = 0 : i64, scratch_operands = 0 : i64, tpu.core_type = #tpu.core_type<tc>, window_params = [{transform_indices = @transform_0, window_bounds = array<i64: 1, 4, 128>}, {transform_indices = @transform_1, window_bounds = array<i64: 1, 4, 128>}, {pipeline_mode = #tpu.pipeline_mode<synchronous>, transform_indices = @transform_2, window_bounds = array<i64: 32, 8>}, {pipeline_mode = #tpu.pipeline_mode<synchronous>, transform_indices = @transform_3, window_bounds = array<i64: 32, 1>}, {pipeline_mode = #tpu.pipeline_mode<synchronous>, transform_indices = @transform_4, window_bounds = array<i64: 1, 32>}, {pipeline_mode = #tpu.pipeline_mode<synchronous>, transform_indices = @transform_5, window_bounds = array<i64: 1, 1>}, {transform_indices = @transform_6, window_bounds = array<i64: 1, 4, 128>}]} {
    %c0 = arith.constant 0 : index
    %c0_0 = arith.constant 0 : index
    %c0_1 = arith.constant 0 : index
    %0 = vector.load %arg3[%c0, %c0_0, %c0_1] : memref<1x4x128xf32, #tpu.memory_space<vmem>>, vector<1x4x128xf32>
    %1 = vector.shape_cast %0 : vector<1x4x128xf32> to vector<4x128xf32>
    %c0_2 = arith.constant 0 : index
    %c0_3 = arith.constant 0 : index
    %c0_4 = arith.constant 0 : index
    %2 = vector.load %arg2[%c0_2, %c0_3, %c0_4] : memref<1x4x128xf32, #tpu.memory_space<vmem>>, vector<1x4x128xf32>
    %3 = vector.shape_cast %2 : vector<1x4x128xf32> to vector<4x128xf32>
    %4 = tpu.concatenate %3, %1 in 0 : vector<4x128xf32>, vector<4x128xf32> -> vector<8x128xf32>
    %5 = arith.truncf %4 : vector<8x128xf32> to vector<8x128xbf16>
    %c0_5 = arith.constant 0 : index
    %c0_6 = arith.constant 0 : index
    %6 = vector.load %arg4[%c0_5, %c0_6] : memref<32x8xbf16, #tpu.memory_space<vmem>>, vector<32x8xbf16>
    %cst = arith.constant dense<0.000000e+00> : vector<32x128xf32>
    %7 = tpu.matmul %6, %5, %cst {dimension_numbers = #tpu.dot_dimension_numbers<[1], [0], [0], [1], [0, 0, 1, 1], [], []>} : vector<32x8xbf16>, vector<8x128xbf16>, vector<32x128xf32> -> vector<32x128xf32>
    %c0_7 = arith.constant 0 : index
    %c0_8 = arith.constant 0 : index
    %8 = vector.load %arg5[%c0_7, %c0_8] : memref<32x1xf32, #tpu.memory_space<vmem>>, vector<32x1xf32>
    %9 = vector.broadcast %8 : vector<32x1xf32> to vector<32x128xf32>
    %10 = arith.addf %7, %9 : vector<32x128xf32>
    %cst_9 = arith.constant 0.000000e+00 : f32
    %11 = vector.broadcast %cst_9 : f32 to vector<32x128xf32>
    %12 = arith.maximumf %10, %11 : vector<32x128xf32>
    %c0_10 = arith.constant 0 : index
    %c0_11 = arith.constant 0 : index
    %13 = vector.load %arg6[%c0_10, %c0_11] : memref<1x32xf32, #tpu.memory_space<vmem>>, vector<1x32xf32>
    %cst_12 = arith.constant dense<0.000000e+00> : vector<1x128xf32>
    %14 = tpu.matmul %13, %12, %cst_12 {dimension_numbers = #tpu.dot_dimension_numbers<[1], [0], [0], [1], [0, 0, 1, 1], [], []>} : vector<1x32xf32>, vector<32x128xf32>, vector<1x128xf32> -> vector<1x128xf32>
    %c0_13 = arith.constant 0 : index
    %c0_14 = arith.constant 0 : index
    %15 = vector.load %arg7[%c0_13, %c0_14] : memref<1x1xf32, #tpu.memory_space<vmem>>, vector<1x1xf32>
    %16 = vector.broadcast %15 : vector<1x1xf32> to vector<1x128xf32>
    %17 = arith.addf %14, %16 : vector<1x128xf32>
    %cst_15 = arith.constant 0.000000e+00 : f32
    %18 = vector.broadcast %cst_15 : f32 to vector<1x128xf32>
    %19 = arith.subf %18, %17 : vector<1x128xf32>
    %20 = math.exp %19 : vector<1x128xf32>
    %cst_16 = arith.constant 1.000000e+00 : f32
    %21 = vector.broadcast %cst_16 : f32 to vector<1x128xf32>
    %22 = arith.addf %21, %20 : vector<1x128xf32>
    %cst_17 = arith.constant 1.000000e+00 : f32
    %23 = vector.broadcast %cst_17 : f32 to vector<1x128xf32>
    %24 = arith.divf %23, %22 : vector<1x128xf32>
    %25 = vector.broadcast %24 : vector<1x128xf32> to vector<4x128xf32>
    %26 = arith.mulf %1, %25 : vector<4x128xf32>
    %c0_18 = arith.constant 0 : index
    %c0_19 = arith.constant 0 : index
    %c0_20 = arith.constant 0 : index
    %27 = vector.load %arg8[%c0_18, %c0_19, %c0_20] : memref<1x4x128xf32, #tpu.memory_space<vmem>>, vector<1x4x128xf32>
    %28 = vector.shape_cast %27 : vector<1x4x128xf32> to vector<4x128xf32>
    %29 = vector.shape_cast %26 : vector<4x128xf32> to vector<1x4x128xf32>
    tpu.vector_store %arg8[%c0_18, %c0_19, %c0_20], %29 {strides = array<i32>} : memref<1x4x128xf32, #tpu.memory_space<vmem>>, vector<1x4x128xf32>,
    return
  }
  func.func @transform_0(%arg0: i32, %arg1: i32) -> (i32, i32, i32) {
    %c0_i32 = arith.constant 0 : i32
    %c0_i32_0 = arith.constant 0 : i32
    return %arg0, %c0_i32, %arg1 : i32, i32, i32
  }
  func.func @transform_1(%arg0: i32, %arg1: i32) -> (i32, i32, i32) {
    %c0_i32 = arith.constant 0 : i32
    %c0_i32_0 = arith.constant 0 : i32
    return %arg0, %c0_i32, %arg1 : i32, i32, i32
  }
  func.func @transform_2(%arg0: i32, %arg1: i32) -> (i32, i32) {
    %c0_i32 = arith.constant 0 : i32
    %c0_i32_0 = arith.constant 0 : i32
    %c0_i32_1 = arith.constant 0 : i32
    return %c0_i32, %c0_i32_0 : i32, i32
  }
  func.func @transform_3(%arg0: i32, %arg1: i32) -> (i32, i32) {
    %c0_i32 = arith.constant 0 : i32
    %c0_i32_0 = arith.constant 0 : i32
    %c0_i32_1 = arith.constant 0 : i32
    return %c0_i32, %c0_i32_0 : i32, i32
  }
  func.func @transform_4(%arg0: i32, %arg1: i32) -> (i32, i32) {
    %c0_i32 = arith.constant 0 : i32
    %c0_i32_0 = arith.constant 0 : i32
    %c0_i32_1 = arith.constant 0 : i32
    return %c0_i32, %c0_i32_0 : i32, i32
  }
  func.func @transform_5(%arg0: i32, %arg1: i32) -> (i32, i32) {
    %c0_i32 = arith.constant 0 : i32
    %c0_i32_0 = arith.constant 0 : i32
    %c0_i32_1 = arith.constant 0 : i32
    return %c0_i32, %c0_i32_0 : i32, i32
  }
  func.func @transform_6(%arg0: i32, %arg1: i32) -> (i32, i32, i32) {
    %c0_i32 = arith.constant 0 : i32
    %c0_i32_0 = arith.constant 0 : i32
    return %arg0, %c0_i32, %arg1 : i32, i32, i32
  }
}

</mosaic_0001>

<llo_original>
// kernel: tpu_custom_call.1
$region0: #{tpu_custom_call.1}
  #allocation0 [shape = 'u32[]', space=smem, size = 0x4, offset = 0x4, fixed_abs, tag = 'smem constant byte address 0x4 - core index']
  #allocation1 [shape = 'u32[72,128]{1,0:T(1,128)}', space=vmem, size = 0x9000, scoped, tag = 'internal scratch']
  #allocation2 [shape = 'f32[1,1]{1,0:T(1,128)S(1)}', space=vmem, size = 0x200, scoped, tag = 'scoped memory for tpu_custom_call.1']
  %s0 = inlined_call_operand.vmem [shape: f32[2,4,256], index: 0, kind: input, shape index: {}]
  %s1 = inlined_call_operand.vmem [shape: f32[2,4,256], index: 1, kind: input, shape index: {}]
  %s2 = inlined_call_operand.vmem [shape: bf16[32,8], index: 2, kind: input, shape index: {}]
  %s3 = inlined_call_operand.vmem [shape: f32[32,1], index: 3, kind: input, shape index: {}]
  %s4 = inlined_call_operand.vmem [shape: f32[1,32], index: 4, kind: input, shape index: {}]
  %s5 = inlined_call_operand.<no memory space> [shape: f32[1,1], index: 5, kind: input, shape index: {}]
  %s6 = inlined_call_operand.hbm [shape: f32[2,4,256], index: 6, kind: output, shape index: {}]
  %s7 = sld [smem:[#allocation0]]
  $region57: #{tpu_custom_call.1} parent=0
    _
  %s9 = ssub.s32 1, %s7
  %s10 = scalar_select 0, %s9, %s7
  %v11 = vstv %s5
  %12 = vst [vmem:[#allocation2] sm:$0x1] %v11
  $region1: #{tpu_custom_call.1} parent=0
    #allocation3 [shape = 'u8[4096]{0}', space=vmem, size = 0x1000, scoped, tag = 'output window, operand 0']
    #allocation4 [shape = 's32[2]{0}', space=sflag, size = 0x8, scoped, tag = 'scoped memory for tpu_custom_call.1']
    %13 = vsyncpa [#allocation4], 0
    %s14 = scalar_lea.sflag [#allocation4], 1
    %15 = vsyncpa %s14, 0
    loop: start=0, step=1, limit=6
    $region2: #{tpu_custom_call.1} parent=1 // loop_pre_header
      _
    $region3: #{tpu_custom_call.1} parent=1 // loop_header
      %s17 = sphi 0, %s21
      %p18 = scmp.ge.s32.totalorder %s17, 6
      %s24 = sphi 0, %s36
      %s25 = sphi 0, %s32
      %s26 = sphi 0, %s24
      %s27 = sphi 0, %s25
      %s28 = sphi 0, %s26
      %s29 = sphi 0, %s27
      %s41 = sphi 0, %s43
      %s44 = sphi 0, %s41
      %s45 = sphi 0, %s44
      %s61 = sphi 0, %s45
      %s69 = sphi 0, %s71
      %s72 = sphi 0, %s69
      %s73 = sphi 0, %s72
      %s89 = sphi 0, %s73
      %s93 = sphi 0, %s93
      %s95 = sphi 0, %s93
      %s96 = sphi 0, %s95
      %s110 = sphi 0, %s96
      %s114 = sphi 0, %s114
      %s116 = sphi 0, %s114
      %s117 = sphi 0, %s116
      %s131 = sphi 0, %s117
      %s135 = sphi 0, %s135
      %s137 = sphi 0, %s135
      %s138 = sphi 0, %s137
      %s152 = sphi 0, %s138
      %s156 = sphi 0, %s156
      %s158 = sphi 0, %s156
      %s159 = sphi 0, %s158
      %s173 = sphi 0, %s159
      %s181 = sphi 0, %s183
      %s184 = sphi 0, %s181
      %s185 = sphi 0, %s184
      %s201 = sphi 0, %s185
    $region4: #{tpu_custom_call.1} parent=1 // loop_header_branch
      %20 = sbr.rel (%p18) target = $region8
    $region5: #{tpu_custom_call.1} parent=1 // loop_body
      %s22 = ssub.s32 %s17, 1
      %s23 = ssub.s32 %s17, 2
      %s30 = sadd.s32 1, %s25
      %p31 = scmp.ge.s32.totalorder %s30, 2
      %s32 = scalar_select %p31, 0, %s30
      %s33 = sadd.s32 1, %s24
      %s34 = scalar_select %p31, %s33, %s24
      %p35 = scmp.ge.s32.totalorder %s34, 2
      %s36 = scalar_select %p35, 0, %s34
      %s37 = ssub.s32 %s24, %s36
      %s38 = ssub.s32 %s25, %s32
      %s39 = sor.u32 %s37, %s38
      %p40 = scmp.eq.s32.totalorder %s39, 0
      %s42 = sadd.s32 %s41, 1
      %s43 = scalar_select %p40, %s41, %s42
      %p46 = pneg %p40
      %p47 = scmp.eq.s32.totalorder %s17, 3
      %p48 = por %p46, %p47
      %p49 = scmp.ne.s32.totalorder %s41, %s44
      %p50 = scmp.eq.s32.totalorder %s17, 0
      %p51 = por %p49, %p50
      %p52 = scmp.ne.s32.totalorder %s41, %s44
      %p53 = scmp.eq.s32.totalorder %s22, 3
      %p54 = por %p52, %p53
      %p55 = scmp.ne.s32.totalorder %s44, %s45
      %p56 = scmp.eq.s32.totalorder %s22, 0
      %p57 = por %p55, %p56
      %p58 = scmp.ne.s32.totalorder %s44, %s45
      %p59 = scmp.eq.s32.totalorder %s23, 3
      %p60 = por %p58, %p59
      %p62 = scmp.ne.s32.totalorder %s45, %s61
      %p63 = scmp.eq.s32.totalorder %s23, 0
      %p64 = por %p62, %p63
      %s65 = ssub.s32 %s24, %s36
      %s66 = ssub.s32 %s25, %s32
      %s67 = sor.u32 %s65, %s66
      %p68 = scmp.eq.s32.totalorder %s67, 0
      %s70 = sadd.s32 %s69, 1
      %s71 = scalar_select %p68, %s69, %s70
      %p74 = pneg %p68
      %p75 = scmp.eq.s32.totalorder %s17, 3
      %p76 = por %p74, %p75
      %p77 = scmp.ne.s32.totalorder %s69, %s72
      %p78 = scmp.eq.s32.totalorder %s17, 0
      %p79 = por %p77, %p78
      %p80 = scmp.ne.s32.totalorder %s69, %s72
      %p81 = scmp.eq.s32.totalorder %s22, 3
      %p82 = por %p80, %p81
      %p83 = scmp.ne.s32.totalorder %s72, %s73
      %p84 = scmp.eq.s32.totalorder %s22, 0
      %p85 = por %p83, %p84
      %p86 = scmp.ne.s32.totalorder %s72, %s73
      %p87 = scmp.eq.s32.totalorder %s23, 3
      %p88 = por %p86, %p87
      %p90 = scmp.ne.s32.totalorder %s73, %s89
      %p91 = scmp.eq.s32.totalorder %s23, 0
      %p92 = por %p90, %p91
      %s94 = sadd.s32 %s93, 1
      %p97 = scmp.eq.s32.totalorder %s17, 3
      %p98 = scmp.ne.s32.totalorder %s93, %s95
      %p99 = scmp.eq.s32.totalorder %s17, 0
      %p100 = por %p98, %p99
      %p101 = scmp.ne.s32.totalorder %s93, %s95
      %p102 = scmp.eq.s32.totalorder %s22, 3
      %p103 = por %p101, %p102
      %p104 = scmp.ne.s32.totalorder %s95, %s96
      %p105 = scmp.eq.s32.totalorder %s22, 0
      %p106 = por %p104, %p105
      %p107 = scmp.ne.s32.totalorder %s95, %s96
      %p108 = scmp.eq.s32.totalorder %s23, 3
      %p109 = por %p107, %p108
      %p111 = scmp.ne.s32.totalorder %s96, %s110
      %p112 = scmp.eq.s32.totalorder %s23, 0
      %p113 = por %p111, %p112
      %s115 = sadd.s32 %s114, 1
      %p118 = scmp.eq.s32.totalorder %s17, 3
      %p119 = scmp.ne.s32.totalorder %s114, %s116
      %p120 = scmp.eq.s32.totalorder %s17, 0
      %p121 = por %p119, %p120
      %p122 = scmp.ne.s32.totalorder %s114, %s116
      %p123 = scmp.eq.s32.totalorder %s22, 3
      %p124 = por %p122, %p123
      %p125 = scmp.ne.s32.totalorder %s116, %s117
      %p126 = scmp.eq.s32.totalorder %s22, 0
      %p127 = por %p125, %p126
      %p128 = scmp.ne.s32.totalorder %s116, %s117
      %p129 = scmp.eq.s32.totalorder %s23, 3
      %p130 = por %p128, %p129
      %p132 = scmp.ne.s32.totalorder %s117, %s131
      %p133 = scmp.eq.s32.totalorder %s23, 0
      %p134 = por %p132, %p133
      %s136 = sadd.s32 %s135, 1
      %p139 = scmp.eq.s32.totalorder %s17, 3
      %p140 = scmp.ne.s32.totalorder %s135, %s137
      %p141 = scmp.eq.s32.totalorder %s17, 0
      %p142 = por %p140, %p141
      %p143 = scmp.ne.s32.totalorder %s135, %s137
      %p144 = scmp.eq.s32.totalorder %s22, 3
      %p145 = por %p143, %p144
      %p146 = scmp.ne.s32.totalorder %s137, %s138
      %p147 = scmp.eq.s32.totalorder %s22, 0
      %p148 = por %p146, %p147
      %p149 = scmp.ne.s32.totalorder %s137, %s138
      %p150 = scmp.eq.s32.totalorder %s23, 3
      %p151 = por %p149, %p150
      %p153 = scmp.ne.s32.totalorder %s138, %s152
      %p154 = scmp.eq.s32.totalorder %s23, 0
      %p155 = por %p153, %p154
      %s157 = sadd.s32 %s156, 1
      %p160 = scmp.eq.s32.totalorder %s17, 3
      %p161 = scmp.ne.s32.totalorder %s156, %s158
      %p162 = scmp.eq.s32.totalorder %s17, 0
      %p163 = por %p161, %p162
      %p164 = scmp.ne.s32.totalorder %s156, %s158
      %p165 = scmp.eq.s32.totalorder %s22, 3
      %p166 = por %p164, %p165
      %p167 = scmp.ne.s32.totalorder %s158, %s159
      %p168 = scmp.eq.s32.totalorder %s22, 0
      %p169 = por %p167, %p168
      %p170 = scmp.ne.s32.totalorder %s158, %s159
      %p171 = scmp.eq.s32.totalorder %s23, 3
      %p172 = por %p170, %p171
      %p174 = scmp.ne.s32.totalorder %s159, %s173
      %p175 = scmp.eq.s32.totalorder %s23, 0
      %p176 = por %p174, %p175
      %s177 = ssub.s32 %s24, %s36
      %s178 = ssub.s32 %s25, %s32
      %s179 = sor.u32 %s177, %s178
      %p180 = scmp.eq.s32.totalorder %s179, 0
      %s182 = sadd.s32 %s181, 1
      %s183 = scalar_select %p180, %s181, %s182
      %p186 = pneg %p180
      %p187 = scmp.eq.s32.totalorder %s17, 3
      %p188 = por %p186, %p187
      %p189 = scmp.ne.s32.totalorder %s181, %s184
      %p190 = scmp.eq.s32.totalorder %s17, 0
      %p191 = por %p189, %p190
      %p192 = scmp.ne.s32.totalorder %s181, %s184
      %p193 = scmp.eq.s32.totalorder %s22, 3
      %p194 = por %p192, %p193
      %p195 = scmp.ne.s32.totalorder %s184, %s185
      %p196 = scmp.eq.s32.totalorder %s22, 0
      %p197 = por %p195, %p196
      %p198 = scmp.ne.s32.totalorder %s184, %s185
      %p199 = scmp.eq.s32.totalorder %s23, 3
      %p200 = por %p198, %p199
      %p202 = scmp.ne.s32.totalorder %s185, %s201
      %p203 = scmp.eq.s32.totalorder %s23, 0
      %p204 = por %p202, %p203
      %p205 = scmp.le.s32.totalorder 1, %s17
      %p206 = scmp.lt.s32.totalorder %s17, 5
      %p207 = pnand %p205, %p206
      %p208 = pneg %p207
      // Predicated region
      $region9: #{tpu_custom_call.1} parent=5 // pred_check
        _
      $region10: #{tpu_custom_call.1} parent=5 // pred_check_branch
        %210 = sbr.rel (%p207) target = $region12
      $region11: #{tpu_custom_call.1} parent=5 // pred_region
        %s211 = ssub.s32 %s17, 1
        // Predicated region
        $region13: #{tpu_custom_call.1} parent=11 // pred_check
          %p212 = pneg %p106
        $region14: #{tpu_custom_call.1} parent=11 // pred_check_branch
          %214 = sbr.rel (%p212) target = $region16
        $region15: #{tpu_custom_call.1} parent=11 // pred_region
          _
        $region16: #{tpu_custom_call.1} parent=11 // pred_fallthru
          _
        // Predicated region
        $region17: #{tpu_custom_call.1} parent=11 // pred_check
          %p215 = pneg %p127
        $region18: #{tpu_custom_call.1} parent=11 // pred_check_branch
          %217 = sbr.rel (%p215) target = $region20
        $region19: #{tpu_custom_call.1} parent=11 // pred_region
          _
        $region20: #{tpu_custom_call.1} parent=11 // pred_fallthru
          _
        // Predicated region
        $region21: #{tpu_custom_call.1} parent=11 // pred_check
          %p218 = pneg %p148
        $region22: #{tpu_custom_call.1} parent=11 // pred_check_branch
          %220 = sbr.rel (%p218) target = $region24
        $region23: #{tpu_custom_call.1} parent=11 // pred_region
          _
        $region24: #{tpu_custom_call.1} parent=11 // pred_fallthru
          _
        // Predicated region
        $region25: #{tpu_custom_call.1} parent=11 // pred_check
          %p221 = pneg %p169
        $region26: #{tpu_custom_call.1} parent=11 // pred_check_branch
          %223 = sbr.rel (%p221) target = $region28
        $region27: #{tpu_custom_call.1} parent=11 // pred_region
          _
        $region28: #{tpu_custom_call.1} parent=11 // pred_fallthru
          _
      $region12: #{tpu_custom_call.1} parent=5 // pred_fallthru
        _
      %p224 = scmp.lt.s32.totalorder %s17, 4
      // Predicated region
      $region29: #{tpu_custom_call.1} parent=5 // pred_check
        %p225 = pneg %p224
      $region30: #{tpu_custom_call.1} parent=5 // pred_check_branch
        %227 = sbr.rel (%p225) target = $region32
      $region31: #{tpu_custom_call.1} parent=5 // pred_region
        // Predicated region
        $region33: #{tpu_custom_call.1} parent=31 // pred_check
          %p228 = pneg %p51
        $region34: #{tpu_custom_call.1} parent=31 // pred_check_branch
          %230 = sbr.rel (%p228) target = $region36
        $region35: #{tpu_custom_call.1} parent=31 // pred_region
          %p231 = scmp.lt.s32.totalorder %s24, 1
          %s232 = scalar_select %p231, %s24, 1
          %p233 = scmp.lt.s32.totalorder %s25, 1
          %s234 = scalar_select %p233, %s25, 1
          %s235 = smul.addr %s232, 2
          %s236 = sadd.s32 %s234, %s235
          %s237 = smul.addr %s236, 4
          %s238 = scalar_lea.vmem %s0, %s237
        $region36: #{tpu_custom_call.1} parent=31 // pred_fallthru
          _
        // Predicated region
        $region37: #{tpu_custom_call.1} parent=31 // pred_check
          %p239 = pneg %p79
        $region38: #{tpu_custom_call.1} parent=31 // pred_check_branch
          %241 = sbr.rel (%p239) target = $region40
        $region39: #{tpu_custom_call.1} parent=31 // pred_region
          %p242 = scmp.lt.s32.totalorder %s24, 1
          %s243 = scalar_select %p242, %s24, 1
          %p244 = scmp.lt.s32.totalorder %s25, 1
          %s245 = scalar_select %p244, %s25, 1
          %s246 = smul.addr %s243, 2
          %s247 = sadd.s32 %s245, %s246
          %s248 = smul.addr %s247, 4
          %s249 = scalar_lea.vmem %s1, %s248
        $region40: #{tpu_custom_call.1} parent=31 // pred_fallthru
          _
      $region32: #{tpu_custom_call.1} parent=5 // pred_fallthru
        _
      %p250 = scmp.le.s32.totalorder 1, %s17
      %p251 = scmp.lt.s32.totalorder %s17, 5
      %p252 = pnand %p250, %p251
      %p253 = pneg %p252
      // Predicated region
      $region41: #{tpu_custom_call.1} parent=5 // pred_check
        _
      $region42: #{tpu_custom_call.1} parent=5 // pred_check_branch
        %255 = sbr.rel (%p252) target = $region44
      $region43: #{tpu_custom_call.1} parent=5 // pred_region
        %s256 = ssub.s32 %s17, 1
        %p257 = scmp.lt.s32.totalorder %s26, 1
        %s258 = scalar_select %p257, %s26, 1
        %p259 = scmp.lt.s32.totalorder %s27, 1
        %s260 = scalar_select %p259, %s27, 1
        %s261 = smul.addr %s258, 2
        %s262 = sadd.s32 %s260, %s261
        %s263 = smul.addr %s262, 4
        %s264 = scalar_lea.vmem %s0, %s263
        %p265 = pneg %p57
        %p266 = pneg %p54
        %p267 = scmp.lt.s32.totalorder %s26, 1
        %s268 = scalar_select %p267, %s26, 1
        %p269 = scmp.lt.s32.totalorder %s27, 1
        %s270 = scalar_select %p269, %s27, 1
        %s271 = smul.addr %s268, 2
        %s272 = sadd.s32 %s270, %s271
        %s273 = smul.addr %s272, 4
        %s274 = scalar_lea.vmem %s1, %s273
        %p275 = pneg %p85
        %p276 = pneg %p82
        %p277 = pneg %p106
        %p278 = pneg %p103
        %p279 = pneg %p127
        %p280 = pneg %p124
        %p281 = pneg %p148
        %p282 = pneg %p145
        %p283 = pneg %p169
        %p284 = pneg %p166
        %p285 = pneg %p197
        %p286 = pneg %p194
        %s287 = sand.u32 %s184, 1
        %s288 = scalar_lea.sflag [#allocation4], %s287
        %s289 = sand.u32 %s184, 1
        %s290 = smul.addr %s289, 4
        %s291 = scalar_lea.vmem [#allocation3], %s290
        %p292 = scmp.lt.s32.totalorder %s26, 1
        %s293 = scalar_select %p292, %s26, 1
        %p294 = scmp.lt.s32.totalorder %s27, 1
        %s295 = scalar_select %p294, %s27, 1
        %s296 = smul.addr %s293, 2
        %s297 = sadd.s32 %s295, %s296
        %s298 = smul.addr %s297, 4
        %s299 = scalar_lea.vmem %s0, %s298
        %p300 = scmp.lt.s32.totalorder %s26, 1
        %s301 = scalar_select %p300, %s26, 1
        %p302 = scmp.lt.s32.totalorder %s27, 1
        %s303 = scalar_select %p302, %s27, 1
        %s304 = smul.addr %s301, 2
        %s305 = sadd.s32 %s303, %s304
        %s306 = smul.addr %s305, 4
        %s307 = scalar_lea.vmem %s1, %s306
        %v309 = vld [vmem:[%s307] sm:$0xf]
        %v310 = vld [vmem:[%s299] sm:$0xf]
        %v312 = vrot.slane %v309, 4
        %vm314 = vcmask 1043456
        %v315 = vsel %vm314, %v310, %v312
        %v316 = vpack.c.bf16 %v315, %v315
        %v317 = vld [vmem:[%s2] sm:$0xf]
        %v318 = vld [vmem:[%s2 + $0x4] sm:$0xf]
        %v319 = vld [vmem:[%s2 + $0x8] sm:$0xf]
        %v320 = vld [vmem:[%s2 + $0xc] sm:$0xf]
        %v321 = vld [vmem:[%s3] sm:$0xff]
        %v322 = vld [vmem:[%s3 + $0x8] sm:$0xff]
        %v323 = vld [vmem:[%s3 + $0x10] sm:$0xff]
        %v324 = vld [vmem:[%s3 + $0x18] sm:$0xff]
        %326 = vset.pattern.permute.xlu0 0
        %327 = vperm.xlu0 %326, %v321
        %v328 = vpop.permute.xlu0 %327
        %331 = vset.pattern.permute.xlu0 0
        %332 = vperm.xlu0 %331, %v322
        %v333 = vpop.permute.xlu0 %332
        %336 = vset.pattern.permute.xlu0 0
        %337 = vperm.xlu0 %336, %v323
        %v338 = vpop.permute.xlu0 %337
        %341 = vset.pattern.permute.xlu0 0
        %342 = vperm.xlu0 %341, %v324
        %v343 = vpop.permute.xlu0 %342
        %v349 = vunpack.c.l.b16 %v317
        %v350 = vunpack.c.l.b16 %v318
        %v351 = vunpack.c.l.b16 %v319
        %v352 = vunpack.c.l.b16 %v320
        %v353 = vpack.c.b16 %v350, %v349
        %v354 = vpack.c.b16 %v352, %v351
        %vm355 = vcmask 64512
        %v357 = vsel %vm355, %v353, 0
        %v360 = vsel %vm355, %v354, 0
        %v363 = vsel %vm314, %v316, 0
        %365 = vmatpush.bf16.msra.mxu0 0
        %366 = vmatpush.bf16.msra.mxu0 0
        %367 = vmatpush.bf16.msra.mxu0 0
        %368 = vmatpush.bf16.msra.mxu0 0
        %369 = vmatpush.bf16.msra.mxu0 0
        %370 = vmatpush.bf16.msra.mxu0 0
        %371 = vmatpush.bf16.msra.mxu0 0
        %372 = vmatpush.bf16.msra.mxu0 %v363
        %373 = vmatmul.bf16.gmra.mxu0 %v357
        %v374 = vpop.f32.mrf.mxu0
        %v375 = vadd.f32 %v328, %v374
        %v376 = vpop.f32.mrf.mxu0
        %v377 = vadd.f32 %v333, %v376
        %378 = vmatmul.bf16.gmra.mxu0 %v360
        %v379 = vpop.f32.mrf.mxu0
        %v380 = vadd.f32 %v338, %v379
        %v381 = vpop.f32.mrf.mxu0
        %v382 = vadd.f32 %v343, %v381
        %383 = vdwg.mxu0
        %v384 = vmax.f32 %v375, 0.0
        %v385 = vmax.f32 %v377, 0.0
        %v386 = vmax.f32 %v380, 0.0
        %v387 = vmax.f32 %v382, 0.0
        %v388 = vld [vmem:[%s4] sm:$0x1]
        %v389 = vld [vmem:[#allocation2] sm:$0x1]
        %391 = vset.pattern.permute.xlu0 0
        %392 = vperm.xlu0 %391, %v389
        %v393 = vpop.permute.xlu0 %392
        %v395 = vperm.slane %v393, 0
        %vm396 = vcmask 261120
        %v398 = vsel %vm396, %v388, 0
        %400 = vmatpush.msra.mxu0 0.0
        %401 = vmatpush.msra.mxu0 0.0
        %402 = vmatpush.msra.mxu0 0.0
        %403 = vmatpush.msra.mxu0 0.0
        %404 = vmatpush.msra.mxu0 0.0
        %405 = vmatpush.msra.mxu0 0.0
        %406 = vmatpush.msra.mxu0 0.0
        %407 = vmatpush.msra.mxu0 0.0
        %408 = vmatpush.msra.mxu0 0.0
        %409 = vmatpush.msra.mxu0 0.0
        %410 = vmatpush.msra.mxu0 0.0
        %411 = vmatpush.msra.mxu0 0.0
        %412 = vmatpush.msra.mxu0 %v387
        %413 = vmatpush.msra.mxu0 %v386
        %414 = vmatpush.msra.mxu0 %v385
        %415 = vmatpush.msra.mxu0 %v384
        %416 = vmatmul.f32.gmra.mxu0 %v398
        %v417 = vpop.f32.mrf.mxu0
        %v418 = vadd.f32 %v395, %v417
        %419 = vdwg.mxu0
        %v420 = vsub.f32 0.0, %v418
        %v421 = vmul.f32 %v420, 1.442695
        %v422 = vpow.pop %v421
        %v423 = vadd.f32 %v422, 1.0
        %v424 = vrcp.pop %v423
        %v425 = vmul.f32 %v423, %v424
        %v426 = vsub.f32 1.0, %v425
        %v427 = vmul.f32 %v424, %v426
        %v428 = vadd.f32 %v424, %v427
        %vm429 = vweird.f32 %v423
        %vm430 = vweird.f32 %v424
        %vm431 = vmor %vm429, %vm430
        %v432 = vsel %vm431, %v424, %v428
        %v433 = vand.u32 2147483647, %v423
        %vm434 = vcmp.eq.f32.partialorder %v433, 8.507059e+37
        %v435 = vand.u32 %v423, 2147483648
        %v436 = vor.u32 1.1754944e-38, %v435
        %v437 = vsel %vm434, %v436, %v432
        %v438 = vmul.f32 1.0, %v437
        %v439 = vperm.slane %v438, 0
        %v440 = vmul.f32 %v309, %v439
        %441 = vst [vmem:[%s291] sm:$0xf] %v440
        %s442 = sand.u32 %s184, 1
        %s443 = scalar_lea.sflag [#allocation4], %s442
        %s444 = sand.u32 %s184, 1
        %s445 = smul.addr %s444, 4
        %s446 = scalar_lea.vmem [#allocation3], %s445
        // Predicated region
        $region45: #{tpu_custom_call.1} parent=43 // pred_check
          %p447 = pneg %p194
        $region46: #{tpu_custom_call.1} parent=43 // pred_check_branch
          %449 = sbr.rel (%p447) target = $region48
        $region47: #{tpu_custom_call.1} parent=43 // pred_region
          %451 = vsyncadd %s443, 0
          %s452 = smul.addr %s26, 2
          %s453 = sadd.s32 %s27, %s452
          %s454 = smul.addr %s453, 4
          %s455 = scalar_lea.hbm %s6, %s454
          %s457 = sshll.u32 %s446, 4
          %s458 = int_to_ptr.vmem [resolvable:$true] %s457
          %s459 = sshll.u32 %s455, 4
          %s460 = int_to_ptr.hbm [resolvable:$true] %s459
          %462 = dma.vmem_to_hbm [thread:$0]  %s458, 64, %s460, %s443
        $region48: #{tpu_custom_call.1} parent=43 // pred_fallthru
          _
      $region44: #{tpu_custom_call.1} parent=5 // pred_fallthru
        _
      %p463 = scmp.le.s32.totalorder 2, %s17
      // Predicated region
      $region49: #{tpu_custom_call.1} parent=5 // pred_check
        %p464 = pneg %p463
      $region50: #{tpu_custom_call.1} parent=5 // pred_check_branch
        %466 = sbr.rel (%p464) target = $region52
      $region51: #{tpu_custom_call.1} parent=5 // pred_region
        %s467 = ssub.s32 %s17, 2
        // Predicated region
        $region53: #{tpu_custom_call.1} parent=51 // pred_check
          %p468 = pneg %p200
        $region54: #{tpu_custom_call.1} parent=51 // pred_check_branch
          %470 = sbr.rel (%p468) target = $region56
        $region55: #{tpu_custom_call.1} parent=51 // pred_region
          %s471 = sand.u32 %s185, 1
          %s472 = scalar_lea.sflag [#allocation4], %s471
          %s473 = sand.u32 %s185, 1
          %s474 = smul.addr %s473, 4
          %s475 = scalar_lea.vmem [#allocation3], %s474
          %477 = dma.done %s472, 64
        $region56: #{tpu_custom_call.1} parent=51 // pred_fallthru
          _
      $region52: #{tpu_custom_call.1} parent=5 // pred_fallthru
        _
    $region6: #{tpu_custom_call.1} parent=1 // loop_footer
      %s21 = sadd.s32 1, %s17
    $region7: #{tpu_custom_call.1} parent=1 // loop_footer_branch
      %16 = sbr.rel target = $region3
    $region8: #{tpu_custom_call.1} parent=1 // loop_exit
      _
    %478 = vsyncpa [#allocation4], 1
    %s479 = scalar_lea.sflag [#allocation4], 1
    %480 = vsyncpa %s479, 1

</llo_original>
